<compile_context>
chip_gen: v7x
topology: tpu7x:2x2x1
jax: 0.10.0
libtpu: 0.0.40
codegen_flags: <defaults>
</compile_context>

<pallas_src>
import jax
import jax.numpy as jnp
from jax.experimental import pallas as pl
from jax.experimental.pallas import tpu as pltpu


def _rescale_kernel(w_ref, x_ref, o_ref):
    # w_ref: (row_tile, 1); x_ref/o_ref: (row_tile, lane_tile)
    o_ref[...] = (x_ref[...] * w_ref[...]).astype(o_ref.dtype)


def _pick_tile(dim: int, align: int, cap: int) -> int:
    """Largest multiple of `align` that divides `dim`, capped at `cap`.

    Falls back to the full dim when `dim` is not a multiple of `align`
    (BlockSpec rule: block dims must be multiples of (8, 128) or equal the
    full array dims).
    """
    if dim % align != 0:
        return dim
    cap = max(align, min(cap, dim))
    best = align
    for t in range(align, cap + 1, align):
        if dim % t == 0:
            best = t
    return best


def rescale(x: jax.Array, weight: jax.Array) -> jax.Array:
    """x: (N, C, H, W); weight: (C, 1, 1) -> out: (N, C, H, W)."""
    N, C, H, W = x.shape
    assert weight.shape == (C, 1, 1)

    out_dtype = jnp.result_type(x.dtype, weight.dtype)
    R, L = N * C, H * W

    # Lane-dense 2D view of the activation; tiny per-row scale column.
    x2 = x.reshape(R, L)
    w_col = (
        jnp.broadcast_to(weight.reshape(1, C), (N, C))
        .reshape(R, 1)
        .astype(out_dtype)
    )

    x_item = jnp.dtype(x.dtype).itemsize
    o_item = jnp.dtype(out_dtype).itemsize

    # Lane axis: wide multiple of 128 (unmasked, lane-dense loads/stores).
    lane_tile = _pick_tile(L, 128, 2048)
    # Sublane axis: multiple of 8 (16 for bf16, 32 for int8) sized so one
    # block stays ~<= 4 MiB -> double-buffered in+out well under scoped VMEM
    # on v5e/v6e/v7x while keeping many grid steps for megacore sharding.
    sub_align = max(8, 32 // min(x_item, o_item))
    row_cap = max(sub_align, (4 * 1024 * 1024) // (lane_tile * max(x_item, o_item)))
    row_tile = _pick_tile(R, sub_align, row_cap)

    grid = (R // row_tile, L // lane_tile)

    out2 = pl.pallas_call(
        _rescale_kernel,
        out_shape=jax.ShapeDtypeStruct((R, L), out_dtype),
        grid_spec=pltpu.PrefetchScalarGridSpec(
            num_scalar_prefetch=0,
            grid=grid,
            in_specs=[
                pl.BlockSpec((row_tile, 1), lambda i, j: (i, 0)),
                pl.BlockSpec((row_tile, lane_tile), lambda i, j: (i, j)),
            ],
            out_specs=pl.BlockSpec((row_tile, lane_tile), lambda i, j: (i, j)),
        ),
        compiler_params=pltpu.CompilerParams(
            dimension_semantics=("parallel", "parallel"),
        ),
    )(w_col, x2)

    return out2.reshape(N, C, H, W)


if __name__ == "__main__":
    key = jax.random.PRNGKey(0)
    kx, kw = jax.random.split(key)

    # Primary test at the module's implied small shape.
    N, C, H, W = 2, 4, 16, 16
    x = jax.random.normal(kx, (N, C, H, W), dtype=jnp.float32)
    # Module __init__ uses ones(num_channels, 1, 1); use a deterministic
    # non-trivial weight so the broadcasted multiply is actually tested.
    weight = jax.random.normal(kw, (C, 1, 1), dtype=jnp.float32)

    out = jax.block_until_ready(rescale(x, weight))
    ref = weight.reshape(1, C, 1, 1) * x
    assert out.shape == x.shape and out.dtype == ref.dtype
    assert jnp.allclose(out, ref, atol=1e-6, rtol=1e-6)

    # Secondary test: odd, non-aligned dims exercise the full-dim fallback.
    k2x, k2w = jax.random.split(jax.random.PRNGKey(1))
    N2, C2, H2, W2 = 2, 3, 5, 7
    x2 = jax.random.normal(k2x, (N2, C2, H2, W2), dtype=jnp.float32)
    w2 = jax.random.normal(k2w, (C2, 1, 1), dtype=jnp.float32)
    out2 = jax.block_until_ready(rescale(x2, w2))
    ref2 = w2.reshape(1, C2, 1, 1) * x2
    assert jnp.allclose(out2, ref2, atol=1e-6, rtol=1e-6)

    print("KERNEL_OK")
</pallas_src>

<mosaic_0001>
module attributes {stable_mosaic.version = 11 : i64} {
  func.func @_rescale_kernel(%arg0: i32, %arg1: i32, %arg2: memref<8x1xf32, #tpu.memory_space<vmem>>, %arg3: memref<8x256xf32, #tpu.memory_space<vmem>>, %arg4: memref<8x256xf32, #tpu.memory_space<vmem>>) attributes {dimension_semantics = [#tpu.dimension_semantics<parallel>, #tpu.dimension_semantics<parallel>], iteration_bounds = array<i64: 1, 1>, scalar_prefetch = 0 : i64, scratch_operands = 0 : i64, tpu.core_type = #tpu.core_type<tc>, window_params = [{transform_indices = @transform_0, window_bounds = array<i64: 8, 1>}, {transform_indices = @transform_1, window_bounds = array<i64: 8, 256>}, {transform_indices = @transform_2, window_bounds = array<i64: 8, 256>}]} {
    %c0 = arith.constant 0 : index
    %c0_0 = arith.constant 0 : index
    %0 = vector.load %arg3[%c0, %c0_0] : memref<8x256xf32, #tpu.memory_space<vmem>>, vector<8x256xf32>
    %c0_1 = arith.constant 0 : index
    %c0_2 = arith.constant 0 : index
    %1 = vector.load %arg2[%c0_1, %c0_2] : memref<8x1xf32, #tpu.memory_space<vmem>>, vector<8x1xf32>
    %2 = vector.broadcast %1 : vector<8x1xf32> to vector<8x256xf32>
    %3 = arith.mulf %0, %2 : vector<8x256xf32>
    %c0_3 = arith.constant 0 : index
    %c0_4 = arith.constant 0 : index
    %4 = vector.load %arg4[%c0_3, %c0_4] : memref<8x256xf32, #tpu.memory_space<vmem>>, vector<8x256xf32>
    tpu.vector_store %arg4[%c0_3, %c0_4], %3 {strides = array<i32>} : memref<8x256xf32, #tpu.memory_space<vmem>>, vector<8x256xf32>,
    return
  }
  func.func @transform_0(%arg0: i32, %arg1: i32) -> (i32, i32) {
    %c0_i32 = arith.constant 0 : i32
    %c0_i32_0 = arith.constant 0 : i32
    return %arg0, %c0_i32 : i32, i32
  }
  func.func @transform_1(%arg0: i32, %arg1: i32) -> (i32, i32) {
    %c0_i32 = arith.constant 0 : i32
    return %arg0, %arg1 : i32, i32
  }
  func.func @transform_2(%arg0: i32, %arg1: i32) -> (i32, i32) {
    %c0_i32 = arith.constant 0 : i32
    return %arg0, %arg1 : i32, i32
  }
}

</mosaic_0001>

<llo_original>
// kernel: tpu_custom_call.1
$region0: #{tpu_custom_call.1}
  #allocation0 [shape = 'u32[]', space=smem, size = 0x4, offset = 0x4, fixed_abs, tag = 'smem constant byte address 0x4 - core index']
  #allocation1 [shape = 'u32[144,128]{1,0:T(1,128)}', space=vmem, size = 0x12000, scoped, tag = 'internal scratch']
  %s0 = inlined_call_operand.vmem [shape: f32[8,1], index: 0, kind: input, shape index: {}]
  %s1 = inlined_call_operand.hbm [shape: f32[8,256], index: 1, kind: input, shape index: {}]
  %s2 = inlined_call_operand.hbm [shape: f32[8,256], index: 2, kind: output, shape index: {}]
  %s3 = sld [smem:[#allocation0]]
  $region22: #{tpu_custom_call.1} parent=0
    _
  %s5 = ssub.s32 1, %s3
  %s6 = scalar_select 0, %s5, %s3
  $region1: #{tpu_custom_call.1} parent=0
    #allocation2 [shape = 'u8[8192]{0}', space=vmem, size = 0x2000, scoped, tag = 'input window, operand 1, single buffered']
    #allocation3 [shape = 's32[1]{0}', space=sflag, size = 0x4, scoped, tag = 'scoped memory for tpu_custom_call.1']
    #allocation4 [shape = 's32[1]{0}', space=sflag, size = 0x4, scoped, tag = 'scoped memory for tpu_custom_call.1']
    #allocation5 [shape = 'u8[8192]{0}', space=vmem, size = 0x2000, scoped, tag = 'output window, operand 0, single buffered']
    %7 = vsyncpa [#allocation3], 0
    %8 = vsyncpa [#allocation4], 0
    // Predicated region
    $region2: #{tpu_custom_call.1} parent=1 // pred_check
      _
    $region3: #{tpu_custom_call.1} parent=1 // pred_check_branch
      %10 = sbr.rel (0) target = $region5
    $region4: #{tpu_custom_call.1} parent=1 // pred_region
      _
    $region5: #{tpu_custom_call.1} parent=1 // pred_fallthru
      _
    // Predicated region
    $region6: #{tpu_custom_call.1} parent=1 // pred_check
      _
    $region7: #{tpu_custom_call.1} parent=1 // pred_check_branch
      %12 = sbr.rel (0) target = $region9
    $region8: #{tpu_custom_call.1} parent=1 // pred_region
      %s14 = ssub.s32 256, 256
      %15 = vsyncadd [#allocation3], %s14
      %s17 = sshll.u32 [#allocation2], 4
      %s18 = int_to_ptr.vmem [resolvable:$true] %s17
      %20 = dma.hbm_to_vmem [thread:$0]  %s1, 256, %s18, [#allocation3]
    $region9: #{tpu_custom_call.1} parent=1 // pred_fallthru
      _
    // Predicated region
    $region10: #{tpu_custom_call.1} parent=1 // pred_check
      _
    $region11: #{tpu_custom_call.1} parent=1 // pred_check_branch
      %22 = sbr.rel (0) target = $region13
    $region12: #{tpu_custom_call.1} parent=1 // pred_region
      %23 = dma.done [#allocation3], 256
    $region13: #{tpu_custom_call.1} parent=1 // pred_fallthru
      _
    %v24 = vld [vmem:[#allocation2] sm:$0xff]
    %v25 = vld [vmem:[#allocation2 + $0x8] sm:$0xff]
    %v26 = vld [vmem:[%s0] sm:$0xff]
    %28 = vset.pattern.permute.xlu0 0
    %29 = vperm.xlu0 %28, %v26
    %v30 = vpop.permute.xlu0 %29
    %v32 = vmul.f32 %v24, %v30
    %v33 = vmul.f32 %v25, %v30
    %34 = vst [vmem:[#allocation5] sm:$0xff] %v32
    %35 = vst [vmem:[#allocation5 + $0x8] sm:$0xff] %v33
    // Predicated region
    $region14: #{tpu_custom_call.1} parent=1 // pred_check
      _
    $region15: #{tpu_custom_call.1} parent=1 // pred_check_branch
      %37 = sbr.rel (0) target = $region17
    $region16: #{tpu_custom_call.1} parent=1 // pred_region
      %s39 = ssub.s32 256, 256
      %40 = vsyncadd [#allocation4], %s39
      %s42 = sshll.u32 [#allocation5], 4
      %s43 = int_to_ptr.vmem [resolvable:$true] %s42
      %45 = dma.vmem_to_hbm [thread:$0]  %s43, 256, %s2, [#allocation4]
    $region17: #{tpu_custom_call.1} parent=1 // pred_fallthru
      _
    // Predicated region
    $region18: #{tpu_custom_call.1} parent=1 // pred_check
      _
    $region19: #{tpu_custom_call.1} parent=1 // pred_check_branch
      %47 = sbr.rel (0) target = $region21
    $region20: #{tpu_custom_call.1} parent=1 // pred_region
      %48 = dma.done [#allocation4], 256
    $region21: #{tpu_custom_call.1} parent=1 // pred_fallthru
      _
    %49 = vsyncpa [#allocation3], 1
    %50 = vsyncpa [#allocation4], 1

</llo_original>
